<compile_context>
chip_gen: v7x
topology: tpu7x:2x2x1
jax: 0.10.0
libtpu: 0.0.40
codegen_flags: <defaults>
</compile_context>

<pallas_src>
import jax
import jax.numpy as jnp
from jax.experimental import pallas as pl
from jax.experimental.pallas import tpu as pltpu

# ----------------------------- sizes ---------------------------------------
B, L = 2, 8                          # batch, frames per example
FRAME = 32                           # wave samples per frame (wave len = L*FRAME)
FEAT, VF, FF, PHF = 32, 16, 16, 32   # predictor split: feature/voiced/f0/phoneme
HID = FEAT + VF + FF + PHF           # 96
NPH = 16                             # number of phoneme classes
NSPK = 4                             # number of speakers
N = B * L                            # total frames (16)

# fused head output column layout (padded to 128 lanes)
C_V = 0                              # voiced logits   [0, 2)
C_PH = 2                             # phoneme logits  [2, 2+NPH)
C_F0 = 2 + NPH                       # f0 regression   [18, 19)
C_SP = 3 + NPH                       # speaker logits  [19, 19+NSPK)
HEAD_PAD = 128
N_SUMS = 9                           # columns in the in-kernel stat matrix
N_OUT = 9                            # final values emitted in the output row

# config.{voiced,f0,phoneme}_loss_weight
W_VOICED, W_F0, W_PHONEME = 1.0, 1.0, 1.0


# ----------------------------- kernel ---------------------------------------
def _ce_and_correct(logits, target):
    """Per-row softmax cross-entropy + argmax-correct indicator.

    logits: (N, C) f32, target: (N, 1) int32.
    Note: ties count as correct; torch.argmax would pick the first max index
    (difference only on exact float ties, ~impossible here).
    """
    m = jnp.max(logits, axis=-1, keepdims=True)
    lse = m + jnp.log(jnp.sum(jnp.exp(logits - m), axis=-1, keepdims=True))
    iota = jax.lax.broadcasted_iota(jnp.int32, logits.shape, 1)
    tl = jnp.sum(jnp.where(iota == target, logits, 0.0), axis=-1, keepdims=True)
    loss = lse - tl
    correct = (tl >= m).astype(jnp.float32)
    return loss, correct


def voice_kernel(x_ref, t_ref, w_ref, b_ref, out_ref):
    # --- ONE MXU push: predictor + all heads fused ---------------------------
    y = jnp.dot(x_ref[...], w_ref[...],
                preferred_element_type=jnp.float32) + b_ref[...]      # (N, 128)

    # --- unpack minimal (N, 4) target slab: [f0, phoneme, speaker, padded] ---
    # Class indices round-trip through f32 (exact for NPH=16 / NSPK=4);
    # keep an int path if class counts grow at production sizes.
    t = t_ref[...]
    f0_t = t[:, 0:1]
    ph_t = t[:, 1:2].astype(jnp.int32)
    sp_t = t[:, 2:3].astype(jnp.int32)
    padded = t[:, 3:4]
    mask = 1.0 - padded                       # 1.0 where not padded
    voiced = (f0_t != 0.0).astype(jnp.float32)
    v_t = voiced.astype(jnp.int32)            # long_voiced
    f0mask = voiced * mask                    # 1.0 where voiced & not padded

    # --- per-row losses / accuracies -----------------------------------------
    v_ce, v_corr = _ce_and_correct(y[:, C_V:C_V + 2], v_t)
    ph_ce, ph_corr = _ce_and_correct(y[:, C_PH:C_PH + NPH], ph_t)
    sp_ce, sp_corr = _ce_and_correct(y[:, C_SP:C_SP + NSPK], sp_t)
    f0_abs = jnp.abs(y[:, C_F0:C_F0 + 1] - f0_t)

    # --- ONE stat matrix, ONE sublane reduction -------------------------------
    stat = jnp.concatenate([
        v_ce * mask,       # 0: sum masked voiced CE
        ph_ce * mask,      # 1: sum masked phoneme CE
        f0_abs * f0mask,   # 2: sum voiced&masked |f0 err|
        sp_ce,             # 3: sum speaker CE (reference: unmasked mean over all frames)
        v_corr * mask,     # 4: masked voiced-correct count
        ph_corr * mask,    # 5: masked phoneme-correct count
        sp_corr,           # 6: speaker-correct count (all frames)
        mask,              # 7: number of unpadded frames
        f0mask,            # 8: number of voiced & unpadded frames
    ], axis=-1)                                            # (N, 9)
    sums = jnp.sum(stat, axis=0, keepdims=True)            # (1, 9)

    # --- in-kernel epilogue: per-lane denominators + EUP reciprocal -----------
    lane = jax.lax.broadcasted_iota(jnp.int32, (1, N_SUMS), 1)
    mask_sum = sums[:, 7:8]
    # Guard: reference would produce NaN (mean of empty tensor) when no frame
    # is both voiced and unpadded; we clamp the denominator instead.
    f0mask_sum = jnp.maximum(sums[:, 8:9], 1.0)
    n_frames = jnp.float32(N)
    denom = jnp.where(lane == 2, f0mask_sum,
                      jnp.where((lane == 3) | (lane == 6), n_frames, mask_sum))
    metrics = sums * pl.reciprocal(denom, approx=True)     # (1, 9)
    # metric lanes: 0 voiced_loss, 1 phoneme_loss, 2 f0_loss, 3 speaker_loss,
    #               4 voiced_acc,  5 phoneme_acc,  6 speaker_acc, 7/8 junk

    voiced_loss = metrics[:, 0:1]
    phoneme_loss = metrics[:, 1:2]
    f0_loss = metrics[:, 2:3]
    speaker_loss = metrics[:, 3:4]
    predictor_loss = (W_VOICED * voiced_loss + W_F0 * f0_loss
                      + W_PHONEME * phoneme_loss)
    loss = predictor_loss + speaker_loss

    # lane-dense output row:
    # [loss, predictor_loss, voiced_loss, phoneme_loss, f0_loss, speaker_loss,
    #  voiced_acc, phoneme_acc, speaker_acc, 0...]
    out_ref[...] = jnp.concatenate(
        [loss, predictor_loss, metrics[:, 0:7],
         jnp.zeros((1, HEAD_PAD - N_OUT), jnp.float32)], axis=-1)


def run_kernel(x_rows, targets, w_fused, b_fused):
    # No grid: the whole (N, FRAME) problem is one VMEM-resident block, so a
    # single grid-less kernel invocation avoids all per-step pipeline overhead.
    # TODO(synk): at production sizes, tile the row axis with a "parallel"
    # grid dimension (2 TCs on v7x) and budget the tile against v7x's 64 MiB
    # physical / 32 MiB default scoped VMEM (raise vmem_limit_bytes if needed).
    vmem = pltpu.MemorySpace.VMEM
    cost = pl.CostEstimate(
        flops=2 * N * FRAME * HEAD_PAD,
        transcendentals=N * (2 + NPH + NSPK) + 3 * N + N_SUMS,
        bytes_accessed=4 * (N * FRAME + N * 4 + FRAME * HEAD_PAD
                            + HEAD_PAD + HEAD_PAD),
    )
    return pl.pallas_call(
        voice_kernel,
        out_shape=jax.ShapeDtypeStruct((1, HEAD_PAD), jnp.float32),
        in_specs=[pl.BlockSpec(memory_space=vmem)] * 4,
        out_specs=pl.BlockSpec(memory_space=vmem),
        cost_estimate=cost,
    )(x_rows, targets, w_fused, b_fused)


# ----------------------------- forward (glue) --------------------------------
@jax.jit
def model_forward(wave, f0, phoneme, padded, speaker, params):
    w_fused, b_fused = params
    # wave: (B, L*FRAME) -> row-major frames (B*L, FRAME)
    x_rows = wave.reshape(N, FRAME)

    # minimal (N, 4) f32 slab: [f0, phoneme, speaker, padded]
    expanded_speaker = jnp.broadcast_to(speaker[:, None], (B, L))
    targets = jnp.stack([
        f0.reshape(N).astype(jnp.float32),
        phoneme.reshape(N).astype(jnp.float32),
        expanded_speaker.reshape(N).astype(jnp.float32),
        padded.reshape(N).astype(jnp.float32),
    ], axis=-1)

    stats = run_kernel(x_rows, targets, w_fused, b_fused)[0]   # (128,)

    loss = stats[0]
    # TODO(synk): report() hook, the speaker=None branch, and the training-mode
    # phoneme_network(feature, phoneme) branch have no kernel equivalent; only
    # the eval-mode forward loss is computed.
    values = dict(loss=stats[0], predictor_loss=stats[1],
                  voiced_loss=stats[2], phoneme_loss=stats[3],
                  f0_loss=stats[4], speaker_loss=stats[5],
                  voiced_accuracy=stats[6], phoneme_accuracy=stats[7],
                  speaker_accuracy=stats[8])
    return loss, values


# ----------------------------- params / inputs -------------------------------
def make_params(key):
    ks = jax.random.split(key, 10)
    s = lambda fan_in: 1.0 / jnp.sqrt(jnp.float32(fan_in))
    wp  = jax.random.normal(ks[0], (FRAME, HID), jnp.float32) * s(FRAME)
    bp  = jax.random.normal(ks[1], (1, HID), jnp.float32) * 0.01
    wv  = jax.random.normal(ks[2], (VF, 2), jnp.float32) * s(VF)
    bv  = jax.random.normal(ks[3], (1, 2), jnp.float32) * 0.01
    wph = jax.random.normal(ks[4], (PHF, NPH), jnp.float32) * s(PHF)
    bph = jax.random.normal(ks[5], (1, NPH), jnp.float32) * 0.01
    wf0 = jax.random.normal(ks[6], (FF, 1), jnp.float32) * s(FF)
    bf0 = jax.random.normal(ks[7], (1, 1), jnp.float32) * 0.01
    wsp = jax.random.normal(ks[8], (FEAT, NSPK), jnp.float32) * s(FEAT)
    bsp = jax.random.normal(ks[9], (1, NSPK), jnp.float32) * 0.01

    # Block-structured, zero-padded (HID, 128) head weight; hidden layout is
    # [feature | voiced | f0 | phoneme].
    wh = jnp.zeros((HID, HEAD_PAD), jnp.float32)
    wh = wh.at[FEAT:FEAT + VF,           C_V:C_V + 2].set(wv)        # voiced
    wh = wh.at[FEAT + VF + FF:HID,       C_PH:C_PH + NPH].set(wph)   # phoneme
    wh = wh.at[FEAT + VF:FEAT + VF + FF, C_F0:C_F0 + 1].set(wf0)     # f0
    wh = wh.at[0:FEAT,                   C_SP:C_SP + NSPK].set(wsp)  # speaker

    bh = jnp.zeros((1, HEAD_PAD), jnp.float32)
    bh = bh.at[:, C_V:C_V + 2].set(bv)
    bh = bh.at[:, C_PH:C_PH + NPH].set(bph)
    bh = bh.at[:, C_F0:C_F0 + 1].set(bf0)
    bh = bh.at[:, C_SP:C_SP + NSPK].set(bsp)

    # Collapse predictor + heads into a single matmul (no nonlinearity between
    # them in the synthesized nets).
    # TODO(synk): do NOT fuse if the real predictor/heads have a nonlinearity;
    # instead pad HID 96->128 and keep two lane-dense MXU passes.
    w_fused = wp @ wh                    # (FRAME, 128)
    b_fused = bp @ wh + bh               # (1, 128)
    return (w_fused, b_fused)


if __name__ == "__main__":
    key = jax.random.PRNGKey(0)
    kp, kw, kf0, kv, kph, ksp = jax.random.split(key, 6)

    params = make_params(kp)

    wave = jax.random.normal(kw, (B, L * FRAME), jnp.float32)
    f0_mag = jax.random.uniform(kf0, (B, L), jnp.float32, 0.1, 1.0)
    voiced_mask = jax.random.bernoulli(kv, 0.7, (B, L))
    f0 = jnp.where(voiced_mask, f0_mag, 0.0)               # zeros = unvoiced
    phoneme = jax.random.randint(kph, (B, L), 0, NPH, jnp.int32)
    speaker = jax.random.randint(ksp, (B,), 0, NSPK, jnp.int32)
    padded = jnp.zeros((B, L), bool).at[1, -2:].set(True)  # last 2 frames padded

    loss, values = model_forward(wave, f0, phoneme, padded, speaker, params)
    loss = jax.block_until_ready(loss)
    assert bool(jnp.isfinite(loss)), "non-finite loss"
    print("KERNEL_OK")
</pallas_src>

<mosaic_0001>
module attributes {stable_mosaic.version = 11 : i64} {
  func.func @voice_kernel(%arg0: memref<16x32xf32, #tpu.memory_space<vmem>>, %arg1: memref<16x4xf32, #tpu.memory_space<vmem>>, %arg2: memref<32x128xf32, #tpu.memory_space<vmem>>, %arg3: memref<1x128xf32, #tpu.memory_space<vmem>>, %arg4: memref<1x128xf32, #tpu.memory_space<vmem>>) attributes {dimension_semantics = [], scalar_prefetch = 0 : i64, scratch_operands = 0 : i64, tpu.core_type = #tpu.core_type<tc>} {
    %c0 = arith.constant 0 : index
    %c0_0 = arith.constant 0 : index
    %0 = vector.load %arg0[%c0, %c0_0] : memref<16x32xf32, #tpu.memory_space<vmem>>, vector<16x32xf32>
    %c0_1 = arith.constant 0 : index
    %c0_2 = arith.constant 0 : index
    %1 = vector.load %arg2[%c0_1, %c0_2] : memref<32x128xf32, #tpu.memory_space<vmem>>, vector<32x128xf32>
    %cst = arith.constant dense<0.000000e+00> : vector<16x128xf32>
    %2 = tpu.matmul %0, %1, %cst {dimension_numbers = #tpu.dot_dimension_numbers<[1], [0], [0], [1], [0, 0, 1, 1], [], []>} : vector<16x32xf32>, vector<32x128xf32>, vector<16x128xf32> -> vector<16x128xf32>
    %c0_3 = arith.constant 0 : index
    %c0_4 = arith.constant 0 : index
    %3 = vector.load %arg3[%c0_3, %c0_4] : memref<1x128xf32, #tpu.memory_space<vmem>>, vector<1x128xf32>
    %4 = vector.broadcast %3 : vector<1x128xf32> to vector<16x128xf32>
    %5 = arith.addf %2, %4 : vector<16x128xf32>
    %c0_5 = arith.constant 0 : index
    %c0_6 = arith.constant 0 : index
    %6 = vector.load %arg1[%c0_5, %c0_6] : memref<16x4xf32, #tpu.memory_space<vmem>>, vector<16x4xf32>
    %7 = vector.extract_strided_slice %6 {offsets = [0, 0], sizes = [16, 1], strides = [1, 1]} : vector<16x4xf32> to vector<16x1xf32>
    %8 = vector.extract_strided_slice %6 {offsets = [0, 1], sizes = [16, 1], strides = [1, 1]} : vector<16x4xf32> to vector<16x1xf32>
    %9 = arith.fptosi %8 : vector<16x1xf32> to vector<16x1xi32>
    %10 = vector.extract_strided_slice %6 {offsets = [0, 2], sizes = [16, 1], strides = [1, 1]} : vector<16x4xf32> to vector<16x1xf32>
    %11 = arith.fptosi %10 : vector<16x1xf32> to vector<16x1xi32>
    %12 = vector.extract_strided_slice %6 {offsets = [0, 3], sizes = [16, 1], strides = [1, 1]} : vector<16x4xf32> to vector<16x1xf32>
    %cst_7 = arith.constant 1.000000e+00 : f32
    %13 = vector.broadcast %cst_7 : f32 to vector<16x1xf32>
    %14 = arith.subf %13, %12 : vector<16x1xf32>
    %cst_8 = arith.constant 0.000000e+00 : f32
    %15 = vector.broadcast %cst_8 : f32 to vector<16x1xf32>
    %16 = arith.cmpf one, %7, %15 : vector<16x1xf32>
    %17 = arith.extui %16 : vector<16x1xi1> to vector<16x1xi32>
    %18 = arith.sitofp %17 : vector<16x1xi32> to vector<16x1xf32>
    %19 = arith.fptosi %18 : vector<16x1xf32> to vector<16x1xi32>
    %20 = arith.mulf %18, %14 : vector<16x1xf32>
    %21 = vector.extract_strided_slice %5 {offsets = [0, 0], sizes = [16, 2], strides = [1, 1]} : vector<16x128xf32> to vector<16x2xf32>
    %cst_9 = arith.constant dense<0xFF800000> : vector<16xf32>
    %22 = vector.multi_reduction <maximumf>, %21, %cst_9 [1] : vector<16x2xf32> to vector<16xf32>
    %23 = vector.shape_cast %22 : vector<16xf32> to vector<16x1xf32>
    %24 = vector.broadcast %23 : vector<16x1xf32> to vector<16x2xf32>
    %25 = arith.subf %21, %24 : vector<16x2xf32>
    %26 = math.exp %25 : vector<16x2xf32>
    %cst_10 = arith.constant dense<0.000000e+00> : vector<16xf32>
    %27 = vector.multi_reduction <add>, %26, %cst_10 [1] : vector<16x2xf32> to vector<16xf32>
    %28 = vector.shape_cast %27 : vector<16xf32> to vector<16x1xf32>
    %29 = math.log %28 : vector<16x1xf32>
    %30 = arith.addf %23, %29 : vector<16x1xf32>
    %31 = tpu.iota {dimensions = array<i32: 1>} : vector<16x2xi32>
    %32 = vector.broadcast %19 : vector<16x1xi32> to vector<16x2xi32>
    %33 = arith.cmpi eq, %31, %32 : vector<16x2xi32>
    %cst_11 = arith.constant 0.000000e+00 : f32
    %34 = vector.broadcast %cst_11 : f32 to vector<16x2xf32>
    %35 = arith.select %33, %21, %34 : vector<16x2xi1>, vector<16x2xf32>
    %cst_12 = arith.constant dense<0.000000e+00> : vector<16xf32>
    %36 = vector.multi_reduction <add>, %35, %cst_12 [1] : vector<16x2xf32> to vector<16xf32>
    %37 = vector.shape_cast %36 : vector<16xf32> to vector<16x1xf32>
    %38 = arith.subf %30, %37 : vector<16x1xf32>
    %39 = arith.cmpf oge, %37, %23 : vector<16x1xf32>
    %40 = arith.extui %39 : vector<16x1xi1> to vector<16x1xi32>
    %41 = arith.sitofp %40 : vector<16x1xi32> to vector<16x1xf32>
    %42 = vector.extract_strided_slice %5 {offsets = [0, 2], sizes = [16, 16], strides = [1, 1]} : vector<16x128xf32> to vector<16x16xf32>
    %cst_13 = arith.constant dense<0xFF800000> : vector<16xf32>
    %43 = vector.multi_reduction <maximumf>, %42, %cst_13 [1] : vector<16x16xf32> to vector<16xf32>
    %44 = vector.shape_cast %43 : vector<16xf32> to vector<16x1xf32>
    %45 = vector.broadcast %44 : vector<16x1xf32> to vector<16x16xf32>
    %46 = arith.subf %42, %45 : vector<16x16xf32>
    %47 = math.exp %46 : vector<16x16xf32>
    %cst_14 = arith.constant dense<0.000000e+00> : vector<16xf32>
    %48 = vector.multi_reduction <add>, %47, %cst_14 [1] : vector<16x16xf32> to vector<16xf32>
    %49 = vector.shape_cast %48 : vector<16xf32> to vector<16x1xf32>
    %50 = math.log %49 : vector<16x1xf32>
    %51 = arith.addf %44, %50 : vector<16x1xf32>
    %52 = tpu.iota {dimensions = array<i32: 1>} : vector<16x16xi32>
    %53 = vector.broadcast %9 : vector<16x1xi32> to vector<16x16xi32>
    %54 = arith.cmpi eq, %52, %53 : vector<16x16xi32>
    %cst_15 = arith.constant 0.000000e+00 : f32
    %55 = vector.broadcast %cst_15 : f32 to vector<16x16xf32>
    %56 = arith.select %54, %42, %55 : vector<16x16xi1>, vector<16x16xf32>
    %cst_16 = arith.constant dense<0.000000e+00> : vector<16xf32>
    %57 = vector.multi_reduction <add>, %56, %cst_16 [1] : vector<16x16xf32> to vector<16xf32>
    %58 = vector.shape_cast %57 : vector<16xf32> to vector<16x1xf32>
    %59 = arith.subf %51, %58 : vector<16x1xf32>
    %60 = arith.cmpf oge, %58, %44 : vector<16x1xf32>
    %61 = arith.extui %60 : vector<16x1xi1> to vector<16x1xi32>
    %62 = arith.sitofp %61 : vector<16x1xi32> to vector<16x1xf32>
    %63 = vector.extract_strided_slice %5 {offsets = [0, 19], sizes = [16, 4], strides = [1, 1]} : vector<16x128xf32> to vector<16x4xf32>
    %cst_17 = arith.constant dense<0xFF800000> : vector<16xf32>
    %64 = vector.multi_reduction <maximumf>, %63, %cst_17 [1] : vector<16x4xf32> to vector<16xf32>
    %65 = vector.shape_cast %64 : vector<16xf32> to vector<16x1xf32>
    %66 = vector.broadcast %65 : vector<16x1xf32> to vector<16x4xf32>
    %67 = arith.subf %63, %66 : vector<16x4xf32>
    %68 = math.exp %67 : vector<16x4xf32>
    %cst_18 = arith.constant dense<0.000000e+00> : vector<16xf32>
    %69 = vector.multi_reduction <add>, %68, %cst_18 [1] : vector<16x4xf32> to vector<16xf32>
    %70 = vector.shape_cast %69 : vector<16xf32> to vector<16x1xf32>
    %71 = math.log %70 : vector<16x1xf32>
    %72 = arith.addf %65, %71 : vector<16x1xf32>
    %73 = tpu.iota {dimensions = array<i32: 1>} : vector<16x4xi32>
    %74 = vector.broadcast %11 : vector<16x1xi32> to vector<16x4xi32>
    %75 = arith.cmpi eq, %73, %74 : vector<16x4xi32>
    %cst_19 = arith.constant 0.000000e+00 : f32
    %76 = vector.broadcast %cst_19 : f32 to vector<16x4xf32>
    %77 = arith.select %75, %63, %76 : vector<16x4xi1>, vector<16x4xf32>
    %cst_20 = arith.constant dense<0.000000e+00> : vector<16xf32>
    %78 = vector.multi_reduction <add>, %77, %cst_20 [1] : vector<16x4xf32> to vector<16xf32>
    %79 = vector.shape_cast %78 : vector<16xf32> to vector<16x1xf32>
    %80 = arith.subf %72, %79 : vector<16x1xf32>
    %81 = arith.cmpf oge, %79, %65 : vector<16x1xf32>
    %82 = arith.extui %81 : vector<16x1xi1> to vector<16x1xi32>
    %83 = arith.sitofp %82 : vector<16x1xi32> to vector<16x1xf32>
    %84 = vector.extract_strided_slice %5 {offsets = [0, 18], sizes = [16, 1], strides = [1, 1]} : vector<16x128xf32> to vector<16x1xf32>
    %85 = arith.subf %84, %7 : vector<16x1xf32>
    %86 = math.absf %85 : vector<16x1xf32>
    %87 = arith.mulf %38, %14 : vector<16x1xf32>
    %88 = arith.mulf %59, %14 : vector<16x1xf32>
    %89 = arith.mulf %86, %20 : vector<16x1xf32>
    %90 = arith.mulf %41, %14 : vector<16x1xf32>
    %91 = arith.mulf %62, %14 : vector<16x1xf32>
    %92 = tpu.concatenate %87, %88, %89, %80, %90, %91, %83, %14, %20 in 1 : vector<16x1xf32>, vector<16x1xf32>, vector<16x1xf32>, vector<16x1xf32>, vector<16x1xf32>, vector<16x1xf32>, vector<16x1xf32>, vector<16x1xf32>, vector<16x1xf32> -> vector<16x9xf32>
    %cst_21 = arith.constant dense<0.000000e+00> : vector<9xf32>
    %93 = vector.multi_reduction <add>, %92, %cst_21 [0] : vector<16x9xf32> to vector<9xf32>
    %94 = vector.shape_cast %93 : vector<9xf32> to vector<1x9xf32>
    %95 = tpu.iota {dimensions = array<i32: 1>} : vector<1x9xi32>
    %96 = vector.extract_strided_slice %94 {offsets = [0, 7], sizes = [1, 1], strides = [1, 1]} : vector<1x9xf32> to vector<1x1xf32>
    %97 = vector.extract_strided_slice %94 {offsets = [0, 8], sizes = [1, 1], strides = [1, 1]} : vector<1x9xf32> to vector<1x1xf32>
    %cst_22 = arith.constant 1.000000e+00 : f32
    %98 = vector.broadcast %cst_22 : f32 to vector<1x1xf32>
    %99 = arith.maximumf %97, %98 : vector<1x1xf32>
    %c2_i32 = arith.constant 2 : i32
    %100 = vector.broadcast %c2_i32 : i32 to vector<1x9xi32>
    %101 = arith.cmpi eq, %95, %100 : vector<1x9xi32>
    %c3_i32 = arith.constant 3 : i32
    %102 = vector.broadcast %c3_i32 : i32 to vector<1x9xi32>
    %103 = arith.cmpi eq, %95, %102 : vector<1x9xi32>
    %c6_i32 = arith.constant 6 : i32
    %104 = vector.broadcast %c6_i32 : i32 to vector<1x9xi32>
    %105 = arith.cmpi eq, %95, %104 : vector<1x9xi32>
    %106 = arith.ori %103, %105 : vector<1x9xi1>
    %cst_23 = arith.constant 1.600000e+01 : f32
    %107 = vector.broadcast %cst_23 : f32 to vector<1x9xf32>
    %108 = vector.shape_cast %96 : vector<1x1xf32> to vector<1x1xf32>
    %109 = vector.broadcast %108 : vector<1x1xf32> to vector<1x9xf32>
    %110 = arith.select %106, %107, %109 : vector<1x9xi1>, vector<1x9xf32>
    %111 = vector.shape_cast %99 : vector<1x1xf32> to vector<1x1xf32>
    %112 = vector.broadcast %111 : vector<1x1xf32> to vector<1x9xf32>
    %113 = arith.select %101, %112, %110 : vector<1x9xi1>, vector<1x9xf32>
    %114 = tpu.reciprocal %113 {approx = true} : vector<1x9xf32> -> vector<1x9xf32>
    %115 = arith.mulf %94, %114 : vector<1x9xf32>
    %116 = vector.extract_strided_slice %115 {offsets = [0, 0], sizes = [1, 1], strides = [1, 1]} : vector<1x9xf32> to vector<1x1xf32>
    %117 = vector.extract_strided_slice %115 {offsets = [0, 1], sizes = [1, 1], strides = [1, 1]} : vector<1x9xf32> to vector<1x1xf32>
    %118 = vector.extract_strided_slice %115 {offsets = [0, 2], sizes = [1, 1], strides = [1, 1]} : vector<1x9xf32> to vector<1x1xf32>
    %119 = vector.extract_strided_slice %115 {offsets = [0, 3], sizes = [1, 1], strides = [1, 1]} : vector<1x9xf32> to vector<1x1xf32>
    %cst_24 = arith.constant 1.000000e+00 : f32
    %120 = vector.broadcast %cst_24 : f32 to vector<1x1xf32>
    %121 = arith.mulf %120, %116 : vector<1x1xf32>
    %cst_25 = arith.constant 1.000000e+00 : f32
    %122 = vector.broadcast %cst_25 : f32 to vector<1x1xf32>
    %123 = arith.mulf %122, %118 : vector<1x1xf32>
    %124 = arith.addf %121, %123 : vector<1x1xf32>
    %cst_26 = arith.constant 1.000000e+00 : f32
    %125 = vector.broadcast %cst_26 : f32 to vector<1x1xf32>
    %126 = arith.mulf %125, %117 : vector<1x1xf32>
    %127 = arith.addf %124, %126 : vector<1x1xf32>
    %128 = arith.addf %127, %119 : vector<1x1xf32>
    %129 = vector.extract_strided_slice %115 {offsets = [0, 0], sizes = [1, 7], strides = [1, 1]} : vector<1x9xf32> to vector<1x7xf32>
    %cst_27 = arith.constant 0.000000e+00 : f32
    %130 = vector.broadcast %cst_27 : f32 to vector<1x119xf32>
    %131 = tpu.concatenate %128, %127, %129, %130 in 1 : vector<1x1xf32>, vector<1x1xf32>, vector<1x7xf32>, vector<1x119xf32> -> vector<1x128xf32>
    %c0_28 = arith.constant 0 : index
    %c0_29 = arith.constant 0 : index
    %132 = vector.load %arg4[%c0_28, %c0_29] : memref<1x128xf32, #tpu.memory_space<vmem>>, vector<1x128xf32>
    tpu.vector_store %arg4[%c0_28, %c0_29], %131 {strides = array<i32>} : memref<1x128xf32, #tpu.memory_space<vmem>>, vector<1x128xf32>,
    return
  }
}

</mosaic_0001>

<llo_original>
// kernel: model_forward.1
$region0: #{model_forward.1}
  #allocation0 [shape = 'u32[]', space=smem, size = 0x4, offset = 0x4, fixed_abs, tag = 'smem constant byte address 0x4 - core index']
  #allocation1 [shape = 'u32[144,128]{1,0:T(1,128)}', space=vmem, size = 0x12000, scoped, tag = 'internal scratch']
  %s0 = inlined_call_operand.vmem [shape: f32[16,32], index: 0, kind: input, shape index: {}]
  %s1 = inlined_call_operand.vmem [shape: f32[16,4], index: 1, kind: input, shape index: {}]
  %s2 = inlined_call_operand.vmem [shape: f32[32,128], index: 2, kind: input, shape index: {}]
  %s3 = inlined_call_operand.vmem [shape: f32[1,128], index: 3, kind: input, shape index: {}]
  %s4 = inlined_call_operand.vmem [shape: f32[1,128], index: 4, kind: output, shape index: {}]
  %s5 = sld [smem:[#allocation0]]
  $region26: #{model_forward.1} parent=0
    _
  %s7 = ssub.s32 1, %s5
  %s8 = scalar_select 0, %s7, %s5
  // Predicated region
  $region2: #{model_forward.1} parent=0 // pred_check
    _
  $region3: #{model_forward.1} parent=0 // pred_check_branch
    %10 = sbr.rel (0) target = $region5
  $region4: #{model_forward.1} parent=0 // pred_region
    _
  $region5: #{model_forward.1} parent=0 // pred_fallthru
    _
  // Predicated region
  $region6: #{model_forward.1} parent=0 // pred_check
    _
  $region7: #{model_forward.1} parent=0 // pred_check_branch
    %12 = sbr.rel (0) target = $region9
  $region8: #{model_forward.1} parent=0 // pred_region
    _
  $region9: #{model_forward.1} parent=0 // pred_fallthru
    _
  // Predicated region
  $region10: #{model_forward.1} parent=0 // pred_check
    _
  $region11: #{model_forward.1} parent=0 // pred_check_branch
    %14 = sbr.rel (0) target = $region13
  $region12: #{model_forward.1} parent=0 // pred_region
    _
  $region13: #{model_forward.1} parent=0 // pred_fallthru
    _
  // Predicated region
  $region14: #{model_forward.1} parent=0 // pred_check
    _
  $region15: #{model_forward.1} parent=0 // pred_check_branch
    %16 = sbr.rel (0) target = $region17
  $region16: #{model_forward.1} parent=0 // pred_region
    _
  $region17: #{model_forward.1} parent=0 // pred_fallthru
    _
  %v17 = vld [vmem:[%s0] sm:$0xff]
  %v18 = vld [vmem:[%s0 + $0x8] sm:$0xff]
  %v19 = vld [vmem:[%s2] sm:$0xff]
  %v20 = vld [vmem:[%s2 + $0x8] sm:$0xff]
  %v21 = vld [vmem:[%s2 + $0x10] sm:$0xff]
  %v22 = vld [vmem:[%s2 + $0x18] sm:$0xff]
  %v23 = vld [vmem:[%s3] sm:$0x1]
  %v25 = vlaneseq
  %v26 = vshrl.u32 %v25, 7
  %v27 = vsub.s32 0, %v26
  %v28 = vrot.slane %v23, %v27
  %vm30 = vcmask 261120
  %v32 = vsel %vm30, %v17, 0
  %v35 = vsel %vm30, %v18, 0
  %37 = vmatprep.subr.mxu0 0.0
  %38 = vmatpush1.msra.mxu0 %v19
  %39 = vmatprep.subr.mxu0 0.0
  %40 = vmatpush1.msra.mxu0 %v20
  %41 = vmatprep.subr.mxu0 0.0
  %42 = vmatpush1.msra.mxu0 %v21
  %43 = vmatprep.subr.mxu0 0.0
  %44 = vmatpush1.msra.mxu0 %v22
  %45 = vmatprep.subr.mxu0 0.0
  %46 = vmatpush1.msra.mxu0 0.0
  %47 = vmatprep.subr.mxu0 0.0
  %48 = vmatpush1.msra.mxu0 0.0
  %49 = vmatprep.subr.mxu0 0.0
  %50 = vmatpush1.msra.mxu0 0.0
  %51 = vmatprep.subr.mxu0 0.0
  %52 = vmatpush1.msra.mxu0 0.0
  %53 = vmatprep.subr.mxu0 0.0
  %54 = vmatpush1.msra.mxu0 0.0
  %55 = vmatprep.subr.mxu0 0.0
  %56 = vmatpush1.msra.mxu0 0.0
  %57 = vmatprep.subr.mxu0 0.0
  %58 = vmatpush1.msra.mxu0 0.0
  %59 = vmatprep.subr.mxu0 0.0
  %60 = vmatpush1.msra.mxu0 0.0
  %61 = vmatprep.subr.mxu0 0.0
  %62 = vmatpush1.msra.mxu0 0.0
  %63 = vmatprep.subr.mxu0 0.0
  %64 = vmatpush1.msra.mxu0 0.0
  %65 = vmatprep.subr.mxu0 0.0
  %66 = vmatpush1.msra.mxu0 0.0
  %67 = vmatprep.subr.mxu0 0.0
  %68 = vmatpush1.msra.mxu0 0.0
  %69 = vmatprep.subr.mxu0 0.0
  %70 = vmatpush1.msra.mxu0 0.0
  %71 = vmatprep.subr.mxu0 0.0
  %72 = vmatpush1.msra.mxu0 0.0
  %73 = vmatprep.subr.mxu0 0.0
  %74 = vmatpush1.msra.mxu0 0.0
  %75 = vmatprep.subr.mxu0 0.0
  %76 = vmatpush1.msra.mxu0 0.0
  %77 = vmatprep.subr.mxu0 0.0
  %78 = vmatpush1.msra.mxu0 0.0
  %79 = vmatprep.subr.mxu0 0.0
  %80 = vmatpush1.msra.mxu0 0.0
  %81 = vmatprep.subr.mxu0 0.0
  %82 = vmatpush1.msra.mxu0 0.0
  %83 = vmatprep.subr.mxu0 0.0
  %84 = vmatpush1.msra.mxu0 0.0
  %85 = vmatprep.subr.mxu0 0.0
  %86 = vmatpush1.msra.mxu0 0.0
  %87 = vmatprep.subr.mxu0 0.0
  %88 = vmatpush1.msra.mxu0 0.0
  %89 = vmatprep.subr.mxu0 0.0
  %90 = vmatpush1.msra.mxu0 0.0
  %91 = vmatprep.subr.mxu0 0.0
  %92 = vmatpush1.msra.mxu0 0.0
  %93 = vmatprep.subr.mxu0 0.0
  %94 = vmatpush1.msra.mxu0 0.0
  %95 = vmatprep.subr.mxu0 0.0
  %96 = vmatpush1.msra.mxu0 0.0
  %97 = vmatprep.subr.mxu0 0.0
  %98 = vmatpush1.msra.mxu0 0.0
  %99 = vmatprep.subr.mxu0 0.0
  %100 = vmatpush1.msra.mxu0 0.0
  %101 = vmatprep.mubr.f32.mxu0 0.0
  %102 = vmatmul.mubr.f32.gmra.mrb[0].mxu0 %v32
  %v103 = vpop.f32.mrb[0].mxu0
  %v104 = vadd.f32 %v28, %v103
  %v105 = vpop.f32.mrb[0].mxu0
  %106 = vmatprep.mubr.f32.mxu0 0.0
  %107 = vmatmul.mubr.f32.gmra.mrb[0].mxu0 %v35
  %v108 = vpop.f32.mrb[0].mxu0
  %v109 = vadd.f32 %v28, %v108
  %v110 = vpop.f32.mrb[0].mxu0
  %111 = vdwg.mxu0
  %v112 = vld [vmem:[%s1] sm:$0xff]
  %v113 = vld [vmem:[%s1 + $0x8] sm:$0xff]
  %v114 = vcvt.f32.s32.to.zero.pseudo %v112
  %v115 = vcvt.f32.s32.to.zero.pseudo %v113
  %v116 = vsub.f32 1.0, %v112
  %v117 = vsub.f32 1.0, %v113
  %vm118 = vcmp.ne.f32.partialorder %v112, 0.0
  %vm119 = vcmp.ne.f32.partialorder %v113, 0.0
  %v120 = vsel %vm118, 1, 0
  %v121 = vsel %vm119, 1, 0
  %v122 = vcvt.s32.f32 %v120
  %v123 = vcvt.s32.f32 %v121
  %v124 = vcvt.f32.s32.to.zero.pseudo %v122
  %v125 = vcvt.f32.s32.to.zero.pseudo %v123
  %128 = vrot.lane.b32.xlu0 %v116, 125
  %v129 = vpop.permute.xlu0 %128
  %130 = vrot.lane.b32.xlu0 %v117, 125
  %v131 = vpop.permute.xlu0 %130
  %v134 = vmul.f32 %v122, %v129
  %v135 = vmul.f32 %v123, %v131
  %vm136 = vcmask 15360
  %v137 = vsel %vm136, %v104, -inf
  %138 = vmax.xlane.f32.xlu0 %v137
  %v139 = vpop.xlane.xlu0 %138
  %v140 = vsel %vm136, %v109, -inf
  %141 = vmax.xlane.f32.xlu0 %v140
  %v142 = vpop.xlane.xlu0 %141
  %v143 = vsub.f32 %v104, %v139
  %v144 = vsub.f32 %v109, %v142
  %v145 = vmul.f32 %v143, 1.442695
  %v146 = vpow.pop %v145
  %v147 = vmul.f32 %v144, 1.442695
  %v148 = vpow.pop %v147
  %v149 = vsel %vm136, %v146, 0.0
  %150 = vadd.xlane.f32.xlu0 %v149
  %v151 = vpop.xlane.xlu0 %150
  %v152 = vsel %vm136, %v148, 0.0
  %153 = vadd.xlane.f32.xlu0 %v152
  %v154 = vpop.xlane.xlu0 %153
  %v155 = vlog2.pop %v151
  %v156 = vmul.f32 %v155, 0.6931472
  %v157 = vlog2.pop %v154
  %v158 = vmul.f32 %v157, 0.6931472
  %v159 = vadd.f32 %v139, %v156
  %v160 = vadd.f32 %v142, %v158
  %v161 = vlaneseq
  %v162 = vand.u32 %v161, 127
  %163 = vset.pattern.permute.xlu0 0
  %164 = vperm.xlu0 %163, %v124
  %v165 = vpop.permute.xlu0 %164
  %166 = vset.pattern.permute.xlu0 0
  %167 = vperm.xlu0 %166, %v125
  %v168 = vpop.permute.xlu0 %167
  %vm169 = vcmp.eq.s32.totalorder %v162, %v165
  %vm170 = vcmp.eq.s32.totalorder %v162, %v168
  %v171 = vsel %vm169, %v104, 0.0
  %v172 = vsel %vm170, %v109, 0.0
  %v173 = vsel %vm136, %v171, 0.0
  %174 = vadd.xlane.f32.xlu0 %v173
  %v175 = vpop.xlane.xlu0 %174
  %v176 = vsel %vm136, %v172, 0.0
  %177 = vadd.xlane.f32.xlu0 %v176
  %v178 = vpop.xlane.xlu0 %177
  %v179 = vsub.f32 %v159, %v175
  %v180 = vsub.f32 %v160, %v178
  %vm181 = vcmp.ge.f32.partialorder %v175, %v139
  %vm182 = vcmp.ge.f32.partialorder %v178, %v142
  %v183 = vsel %vm181, 1, 0
  %v184 = vsel %vm182, 1, 0
  %v185 = vcvt.s32.f32 %v183
  %v186 = vcvt.s32.f32 %v184
  %vm187 = vcmask 146448
  %v188 = vsel %vm187, %v104, -inf
  %189 = vmax.xlane.f32.xlu0 %v188
  %v190 = vpop.xlane.xlu0 %189
  %v191 = vsel %vm187, %v109, -inf
  %192 = vmax.xlane.f32.xlu0 %v191
  %v193 = vpop.xlane.xlu0 %192
  %v194 = vsub.f32 %v104, %v190
  %v195 = vsub.f32 %v109, %v193
  %v196 = vmul.f32 %v194, 1.442695
  %v197 = vpow.pop %v196
  %v198 = vmul.f32 %v195, 1.442695
  %v199 = vpow.pop %v198
  %202 = vrot.lane.b32.xlu0 %v197, 126
  %v203 = vpop.permute.xlu0 %202
  %204 = vrot.lane.b32.xlu0 %v199, 126
  %v205 = vpop.permute.xlu0 %204
  %vm208 = vcmask 130048
  %v209 = vsel %vm208, %v203, 0.0
  %210 = vadd.xlane.f32.xlu0 %v209
  %v211 = vpop.xlane.xlu0 %210
  %v212 = vsel %vm208, %v205, 0.0
  %213 = vadd.xlane.f32.xlu0 %v212
  %v214 = vpop.xlane.xlu0 %213
  %v215 = vlog2.pop %v211
  %v216 = vmul.f32 %v215, 0.6931472
  %v217 = vlog2.pop %v214
  %v218 = vmul.f32 %v217, 0.6931472
  %v219 = vadd.f32 %v190, %v216
  %v220 = vadd.f32 %v193, %v218
  %221 = vset.pattern.permute.xlu0 1
  %222 = vperm.xlu0 %221, %v114
  %v223 = vpop.permute.xlu0 %222
  %224 = vset.pattern.permute.xlu0 1
  %225 = vperm.xlu0 %224, %v115
  %v226 = vpop.permute.xlu0 %225
  %vm227 = vcmp.eq.s32.totalorder %v162, %v223
  %vm228 = vcmp.eq.s32.totalorder %v162, %v226
  %231 = vrot.lane.b32.xlu0 %v104, 126
  %v232 = vpop.permute.xlu0 %231
  %233 = vrot.lane.b32.xlu0 %v109, 126
  %v234 = vpop.permute.xlu0 %233
  %v237 = vsel %vm227, %v232, 0.0
  %v238 = vsel %vm228, %v234, 0.0
  %v239 = vsel %vm208, %v237, 0.0
  %240 = vadd.xlane.f32.xlu0 %v239
  %v241 = vpop.xlane.xlu0 %240
  %v242 = vsel %vm208, %v238, 0.0
  %243 = vadd.xlane.f32.xlu0 %v242
  %v244 = vpop.xlane.xlu0 %243
  %v245 = vsub.f32 %v219, %v241
  %v246 = vsub.f32 %v220, %v244
  %vm247 = vcmp.ge.f32.partialorder %v241, %v190
  %vm248 = vcmp.ge.f32.partialorder %v244, %v193
  %v249 = vsel %vm247, 1, 0
  %v250 = vsel %vm248, 1, 0
  %v251 = vcvt.s32.f32 %v249
  %v252 = vcvt.s32.f32 %v250
  %vm253 = vcmask 187544
  %v254 = vsel %vm253, %v104, -inf
  %255 = vmax.xlane.f32.xlu0 %v254
  %v256 = vpop.xlane.xlu0 %255
  %v257 = vsel %vm253, %v109, -inf
  %258 = vmax.xlane.f32.xlu0 %v257
  %v259 = vpop.xlane.xlu0 %258
  %v260 = vsub.f32 %v104, %v256
  %v261 = vsub.f32 %v109, %v259
  %v262 = vmul.f32 %v260, 1.442695
  %v263 = vpow.pop %v262
  %v264 = vmul.f32 %v261, 1.442695
  %v265 = vpow.pop %v264
  %268 = vrot.lane.b32.xlu0 %v263, 109
  %v269 = vpop.permute.xlu0 %268
  %270 = vrot.lane.b32.xlu0 %v265, 109
  %v271 = vpop.permute.xlu0 %270
  %vm274 = vcmask 31744
  %v275 = vsel %vm274, %v269, 0.0
  %276 = vadd.xlane.f32.xlu0 %v275
  %v277 = vpop.xlane.xlu0 %276
  %v278 = vsel %vm274, %v271, 0.0
  %279 = vadd.xlane.f32.xlu0 %v278
  %v280 = vpop.xlane.xlu0 %279
  %v281 = vlog2.pop %v277
  %v282 = vmul.f32 %v281, 0.6931472
  %v283 = vlog2.pop %v280
  %v284 = vmul.f32 %v283, 0.6931472
  %v285 = vadd.f32 %v256, %v282
  %v286 = vadd.f32 %v259, %v284
  %287 = vset.pattern.permute.xlu0 2
  %288 = vperm.xlu0 %287, %v114
  %v289 = vpop.permute.xlu0 %288
  %290 = vset.pattern.permute.xlu0 2
  %291 = vperm.xlu0 %290, %v115
  %v292 = vpop.permute.xlu0 %291
  %vm293 = vcmp.eq.s32.totalorder %v162, %v289
  %vm294 = vcmp.eq.s32.totalorder %v162, %v292
  %295 = vrot.lane.b32.xlu0 %v104, 109
  %v296 = vpop.permute.xlu0 %295
  %297 = vrot.lane.b32.xlu0 %v109, 109
  %v298 = vpop.permute.xlu0 %297
  %v301 = vsel %vm293, %v296, 0.0
  %v302 = vsel %vm294, %v298, 0.0
  %v303 = vsel %vm274, %v301, 0.0
  %304 = vadd.xlane.f32.xlu0 %v303
  %v305 = vpop.xlane.xlu0 %304
  %v306 = vsel %vm274, %v302, 0.0
  %307 = vadd.xlane.f32.xlu0 %v306
  %v308 = vpop.xlane.xlu0 %307
  %v309 = vsub.f32 %v285, %v305
  %v310 = vsub.f32 %v286, %v308
  %vm311 = vcmp.ge.f32.partialorder %v305, %v256
  %vm312 = vcmp.ge.f32.partialorder %v308, %v259
  %v313 = vsel %vm311, 1, 0
  %v314 = vsel %vm312, 1, 0
  %v315 = vcvt.s32.f32 %v313
  %v316 = vcvt.s32.f32 %v314
  %319 = vrot.lane.b32.xlu0 %v112, 18
  %v320 = vpop.permute.xlu0 %319
  %321 = vrot.lane.b32.xlu0 %v113, 18
  %v322 = vpop.permute.xlu0 %321
  %v325 = vsub.f32 %v104, %v320
  %v326 = vsub.f32 %v109, %v322
  %v327 = vand.u32 2147483647, %v325
  %v328 = vand.u32 2147483647, %v326
  %v329 = vmul.f32 %v179, %v116
  %v330 = vmul.f32 %v180, %v117
  %v331 = vmul.f32 %v245, %v116
  %v332 = vmul.f32 %v246, %v117
  %335 = vrot.lane.b32.xlu0 %v134, 18
  %v336 = vpop.permute.xlu0 %335
  %337 = vrot.lane.b32.xlu0 %v135, 18
  %v338 = vpop.permute.xlu0 %337
  %v341 = vmul.f32 %v327, %v336
  %v342 = vmul.f32 %v328, %v338
  %v343 = vmul.f32 %v185, %v116
  %v344 = vmul.f32 %v186, %v117
  %v345 = vmul.f32 %v251, %v116
  %v346 = vmul.f32 %v252, %v117
  %349 = vrot.lane.b32.xlu0 %v329, 125
  %v350 = vpop.permute.xlu0 %349
  %351 = vrot.lane.b32.xlu0 %v330, 125
  %v352 = vpop.permute.xlu0 %351
  %357 = vrot.lane.b32.xlu0 %v331, 126
  %v358 = vpop.permute.xlu0 %357
  %359 = vrot.lane.b32.xlu0 %v332, 126
  %v360 = vpop.permute.xlu0 %359
  %365 = vrot.lane.b32.xlu0 %v341, 112
  %v366 = vpop.permute.xlu0 %365
  %367 = vrot.lane.b32.xlu0 %v342, 112
  %v368 = vpop.permute.xlu0 %367
  %373 = vrot.lane.b32.xlu0 %v343, 1
  %v374 = vpop.permute.xlu0 %373
  %375 = vrot.lane.b32.xlu0 %v344, 1
  %v376 = vpop.permute.xlu0 %375
  %381 = vrot.lane.b32.xlu0 %v345, 2
  %v382 = vpop.permute.xlu0 %381
  %383 = vrot.lane.b32.xlu0 %v346, 2
  %v384 = vpop.permute.xlu0 %383
  %387 = vrot.lane.b32.xlu0 %v116, 4
  %v388 = vpop.permute.xlu0 %387
  %389 = vrot.lane.b32.xlu0 %v117, 4
  %v390 = vpop.permute.xlu0 %389
  %393 = vrot.lane.b32.xlu0 %v134, 8
  %v394 = vpop.permute.xlu0 %393
  %395 = vrot.lane.b32.xlu0 %v135, 8
  %v396 = vpop.permute.xlu0 %395
  %vm399 = vcmask 7168
  %v400 = vsel %vm399, %v350, %v358
  %v401 = vsel %vm399, %v352, %v360
  %v402 = vsel %vm136, %v400, %v366
  %v403 = vsel %vm136, %v401, %v368
  %vm404 = vcmask 23552
  %v405 = vsel %vm404, %v402, %v309
  %v406 = vsel %vm404, %v403, %v310
  %v407 = vsel %vm274, %v405, %v374
  %v408 = vsel %vm274, %v406, %v376
  %vm409 = vcmask 39936
  %v410 = vsel %vm409, %v407, %v382
  %v411 = vsel %vm409, %v408, %v384
  %vm412 = vcmask 48128
  %v413 = vsel %vm412, %v410, %v315
  %v414 = vsel %vm412, %v411, %v316
  %vm415 = vcmask 56320
  %v416 = vsel %vm415, %v413, %v388
  %v417 = vsel %vm415, %v414, %v390
  %vm418 = vcmask 64512
  %v419 = vsel %vm418, %v416, %v394
  %v420 = vsel %vm418, %v417, %v396
  %vm421 = vcmask 72704
  %v422 = vsel %vm421, %v419, 0.0
  %v423 = vsel %vm421, %v420, 0.0
  %v424 = vadd.f32 %v422, %v423
  %v425 = vrot.slane %v424, 4
  %v426 = vadd.f32 %v424, %v425
  %v427 = vrot.slane %v426, 2
  %v428 = vadd.f32 %v426, %v427
  %v429 = vrot.slane %v428, 1
  %v430 = vadd.f32 %v428, %v429
  %v431 = vmax.f32 %v430, 1.0
  %vm432 = vcmp.eq.s32.totalorder %v162, 2
  %vm433 = vcmp.eq.s32.totalorder %v162, 3
  %vm434 = vcmp.eq.s32.totalorder %v162, 6
  %vm435 = vmor %vm433, %vm434
  %437 = vset.pattern.permute.xlu0 7
  %438 = vperm.xlu0 %437, %v430
  %v439 = vpop.permute.xlu0 %438
  %v441 = vsel %vm435, 16.0, %v439
  %443 = vset.pattern.permute.xlu0 8
  %444 = vperm.xlu0 %443, %v431
  %v445 = vpop.permute.xlu0 %444
  %v447 = vsel %vm432, %v445, %v441
  %v448 = vrcp.pop %v447
  %v449 = vmul.f32 %v430, %v448
  %451 = vrot.lane.b32.xlu0 %v449, 126
  %v452 = vpop.permute.xlu0 %451
  %v454 = vadd.f32 %v449, %v452
  %455 = vrot.lane.b32.xlu0 %v449, 127
  %v456 = vpop.permute.xlu0 %455
  %v458 = vadd.f32 %v454, %v456
  %459 = vrot.lane.b32.xlu0 %v449, 125
  %v460 = vpop.permute.xlu0 %459
  %v462 = vadd.f32 %v458, %v460
  %464 = vrot.lane.b32.xlu0 %v458, 1
  %v465 = vpop.permute.xlu0 %464
  %467 = vrot.lane.b32.xlu0 %v449, 2
  %v468 = vpop.permute.xlu0 %467
  %v470 = vsel %vm399, %v462, %v465
  %v471 = vsel %vm136, %v470, %v468
  %v472 = vsel %vm421, %v471, 0.0
  %473 = vst [vmem:[%s4] sm:$0x1] %v472
  // Predicated region
  $region18: #{model_forward.1} parent=0 // pred_check
    _
  $region19: #{model_forward.1} parent=0 // pred_check_branch
    %475 = sbr.rel (0) target = $region21
  $region20: #{model_forward.1} parent=0 // pred_region
    _
  $region21: #{model_forward.1} parent=0 // pred_fallthru
    _
  // Predicated region
  $region22: #{model_forward.1} parent=0 // pred_check
    _
  $region23: #{model_forward.1} parent=0 // pred_check_branch
    %477 = sbr.rel (0) target = $region25
  $region24: #{model_forward.1} parent=0 // pred_region
    _
  $region25: #{model_forward.1} parent=0 // pred_fallthru
    _

</llo_original>
